<compile_context>
chip_gen: v7x
topology: tpu7x:2x2x1
jax: 0.10.0
libtpu: 0.0.40
codegen_flags: <defaults>
</compile_context>

<pallas_src>
import functools
import math

import jax
import jax.numpy as jnp
from jax.experimental import pallas as pl
from jax.experimental.pallas import tpu as pltpu


_INV_SQRT2 = 1.0 / math.sqrt(2.0)


def _gelu(h, approx_tanh):
    if approx_tanh:
        # tanh runs on the EUP (separate bundle slot) -- use only when the VALU
        # is the bottleneck AND the torch-exact-erf match is not required.
        return jax.nn.gelu(h, approximate=True)
    # Exact GELU, matches torch.nn.GELU() default (approximate='none').
    return 0.5 * h * (1.0 + jax.lax.erf(h * _INV_SQRT2))


# --------------------------------------------------------------------------
# Kernels
# --------------------------------------------------------------------------
def _mlp_resident_kernel(x_ref, w1_ref, b1_ref, w2_ref, b2_ref, o_ref, *,
                         approx_tanh):
    # x_ref: (tm, C) native dtype   w1_ref: (C, H) bf16   b1_ref: (1, H) f32
    # w2_ref: (H, C) bf16           b2_ref: (1, C) f32    o_ref:  (tm, C)
    # In-kernel cast to the MXU dtype (cheap VPU work hidden under the MXU).
    x = x_ref[...].astype(w1_ref.dtype)
    h = jnp.dot(x, w1_ref[...], preferred_element_type=jnp.float32) + b1_ref[...]
    g = _gelu(h, approx_tanh)
    o = jnp.dot(g.astype(w2_ref.dtype), w2_ref[...],
                preferred_element_type=jnp.float32) + b2_ref[...]
    o_ref[...] = o.astype(o_ref.dtype)


def _mlp_htiled_kernel(x_ref, w1_ref, b1_ref, w2_ref, b2_ref, o_ref, acc_ref, *,
                       approx_tanh):
    # H-tiled variant: grid = (M-steps, H-steps); weights streamed per H step,
    # fp32 accumulator in VMEM scratch.
    hstep = pl.program_id(1)

    @pl.when(hstep == 0)
    def _():
        acc_ref[...] = jnp.zeros_like(acc_ref)

    x = x_ref[...].astype(w1_ref.dtype)
    h = jnp.dot(x, w1_ref[...], preferred_element_type=jnp.float32) + b1_ref[...]
    g = _gelu(h, approx_tanh)
    acc_ref[...] += jnp.dot(g.astype(w2_ref.dtype), w2_ref[...],
                            preferred_element_type=jnp.float32)

    @pl.when(hstep == pl.num_programs(1) - 1)
    def _():
        o_ref[...] = (acc_ref[...] + b2_ref[...]).astype(o_ref.dtype)


# --------------------------------------------------------------------------
# Wrapper helpers
# --------------------------------------------------------------------------
def _round_up(a, b):
    return (a + b - 1) // b * b


def _vmem_capacity_bytes():
    try:
        return int(pltpu.get_tpu_info().vmem_capacity_bytes)
    except Exception:
        return 64 << 20  # conservative fallback: v7x per-TensorCore VMEM


def _choose_tm(M, tm_max):
    if M <= 256:
        # Single small tile; 16-row granularity (bf16 packs 2 rows per sublane).
        return _round_up(M, 16)
    # Guarantee >= 2 M-steps so dimension_semantics=("parallel",) feeds both
    # TensorCores on v7x; keep a multiple of 256 (MXU height).
    return max(256, min(tm_max, _round_up(pl.cdiv(M, 2), 256)))


def _pick_th(C, H, tm, wt_isz, tile_bytes, budget, force_th=None):
    def need(th):
        return (2 * 2 * C * th * wt_isz      # double-buffered w1/w2 H-blocks
                + 2 * th * 4 + C * 4         # b1 H-blocks + resident b2
                + tile_bytes                 # double-buffered x / out tiles
                + tm * C * 4                 # fp32 accumulator scratch
                + 2 * tm * th * 4            # fc1/GELU fp32 intermediates
                + (4 << 20))                 # headroom

    if force_th is not None:
        return force_th, need(force_th)
    for th in (4096, 2048, 1024, 512, 256, 128):
        if H % th == 0 and need(th) <= budget:
            return th, need(th)
    th = 128 if H % 128 == 0 else H          # last resort
    return th, need(th)


def prepare_mlp_params(w1, b1, w2, b2, matmul_dtype=jnp.bfloat16):
    """One-time parameter prep: cast weights to the MXU dtype, biases to fp32
    with shape (1, N). Do this at setup time, NOT per forward call."""
    H = w1.shape[1]
    C = w2.shape[1]
    return (w1.astype(matmul_dtype), b1.reshape(1, H).astype(jnp.float32),
            w2.astype(matmul_dtype), b2.reshape(1, C).astype(jnp.float32))


# --------------------------------------------------------------------------
# Public entry point
# --------------------------------------------------------------------------
def mlp_pallas(x, w1, b1, w2, b2, *, tm=512, matmul_dtype=jnp.bfloat16,
               out_dtype=None, approx_tanh_gelu=False,
               force_h_tiled=False, force_th=None):
    """x: (B, T, C); w1: (C, H); b1: (H,)|(1,H); w2: (H, C); b2: (C,)|(1,C).

    Weights are stored transposed vs. torch ((in_features, out_features)), so
    the kernel computes x @ W + b directly on the MXU. Pre-cast weights once
    with prepare_mlp_params() so the per-call casts below are no-ops.
    """
    B, T, C = x.shape
    H = w1.shape[1]
    M = B * T
    out_dtype = x.dtype if out_dtype is None else out_dtype

    # No-ops when params were prepared once via prepare_mlp_params().
    w1 = w1.astype(matmul_dtype)
    w2 = w2.astype(matmul_dtype)
    b1 = b1.reshape(1, H).astype(jnp.float32)
    b2 = b2.reshape(1, C).astype(jnp.float32)

    wt_isz = jnp.dtype(matmul_dtype).itemsize
    x_isz = jnp.dtype(x.dtype).itemsize
    o_isz = jnp.dtype(out_dtype).itemsize

    tm_eff = _choose_tm(M, tm)
    Mp = _round_up(M, tm_eff)

    # x stays in its native dtype in HBM (cast happens in-kernel). The reshape
    # is free for contiguous layouts; rows are only padded when M is ragged.
    x2 = x.reshape(M, C)
    if Mp != M:
        x2 = jnp.pad(x2, ((0, Mp - M), (0, 0)))

    budget = int(0.85 * _vmem_capacity_bytes())   # leave compiler-scratch headroom

    tile_bytes = 2 * tm_eff * C * x_isz + 2 * tm_eff * C * o_isz
    resident_need = (2 * C * H * wt_isz + (H + C) * 4 + tile_bytes
                     + 2 * tm_eff * H * 4 + (4 << 20))

    cost = pl.CostEstimate(
        flops=4 * M * C * H,                       # two matmuls of 2*M*C*H flops
        transcendentals=M * H,                     # erf / tanh
        bytes_accessed=(M * C * (x_isz + o_isz)
                        + 2 * C * H * wt_isz + (H + C) * 4))

    common = dict(out_shape=jax.ShapeDtypeStruct((Mp, C), out_dtype),
                  cost_estimate=cost)

    if not force_h_tiled and resident_need <= budget:
        # ---- Path A: whole bf16 weights resident in VMEM (single-buffered) ----
        kernel = functools.partial(_mlp_resident_kernel,
                                   approx_tanh=approx_tanh_gelu)
        vmem_limit = int(min(max(resident_need, 32 << 20), budget))
        out = pl.pallas_call(
            kernel,
            grid=(Mp // tm_eff,),
            in_specs=[
                pl.BlockSpec((tm_eff, C), lambda i: (i, 0)),            # x streamed
                pl.BlockSpec((C, H), lambda i: (0, 0),
                             pipeline_mode=pl.Buffered(1)),             # w1 resident
                pl.BlockSpec((1, H), lambda i: (0, 0),
                             pipeline_mode=pl.Buffered(1)),             # b1
                pl.BlockSpec((H, C), lambda i: (0, 0),
                             pipeline_mode=pl.Buffered(1)),             # w2 resident
                pl.BlockSpec((1, C), lambda i: (0, 0),
                             pipeline_mode=pl.Buffered(1)),             # b2
            ],
            out_specs=pl.BlockSpec((tm_eff, C), lambda i: (i, 0)),
            compiler_params=pltpu.CompilerParams(
                dimension_semantics=("parallel",),
                vmem_limit_bytes=vmem_limit),
            **common,
        )(x2, w1, b1, w2, b2)
    else:
        # ---- Path B: H-tiled (weights streamed over H, fp32 accumulator) ------
        th, need = _pick_th(C, H, tm_eff, wt_isz, tile_bytes, budget, force_th)
        kernel = functools.partial(_mlp_htiled_kernel,
                                   approx_tanh=approx_tanh_gelu)
        vmem_limit = int(min(max(need, 32 << 20), budget))
        out = pl.pallas_call(
            kernel,
            grid=(Mp // tm_eff, H // th),
            in_specs=[
                pl.BlockSpec((tm_eff, C), lambda i, h: (i, 0)),         # x (revisited)
                pl.BlockSpec((C, th), lambda i, h: (0, h)),             # w1 H-block
                pl.BlockSpec((1, th), lambda i, h: (0, h)),             # b1 H-block
                pl.BlockSpec((th, C), lambda i, h: (h, 0)),             # w2 H-block
                pl.BlockSpec((1, C), lambda i, h: (0, 0),
                             pipeline_mode=pl.Buffered(1)),             # b2 resident
            ],
            out_specs=pl.BlockSpec((tm_eff, C), lambda i, h: (i, 0)),
            scratch_shapes=[pltpu.VMEM((tm_eff, C), jnp.float32)],      # accumulator
            compiler_params=pltpu.CompilerParams(
                dimension_semantics=("parallel", "arbitrary"),
                vmem_limit_bytes=vmem_limit),
            **common,
        )(x2, w1, b1, w2, b2)

    if Mp != M:
        out = out[:M]
    return out.reshape(B, T, C)


# --------------------------------------------------------------------------
# References
# --------------------------------------------------------------------------
def mlp_reference_f32(x, w1, b1, w2, b2):
    h = jnp.einsum("btc,ch->bth", x, w1) + b1
    g = 0.5 * h * (1.0 + jax.lax.erf(h * _INV_SQRT2))
    return jnp.einsum("bth,hc->btc", g, w2) + b2


def mlp_reference_bf16(x, w1, b1, w2, b2):
    # Mirrors the kernel numerics: bf16 matmul inputs, fp32 accumulation,
    # fp32 bias add and exact-erf GELU.
    xb = x.astype(jnp.bfloat16)
    h = jnp.einsum("btc,ch->bth", xb, w1.astype(jnp.bfloat16),
                   preferred_element_type=jnp.float32) + b1
    g = 0.5 * h * (1.0 + jax.lax.erf(h * _INV_SQRT2))
    o = jnp.einsum("bth,hc->btc", g.astype(jnp.bfloat16),
                   w2.astype(jnp.bfloat16),
                   preferred_element_type=jnp.float32) + b2
    return o


if __name__ == "__main__":
    key = jax.random.PRNGKey(0)

    def make_params(k, C, H):
        k1, k2, k3, k4 = jax.random.split(k, 4)
        bound1 = 1.0 / math.sqrt(C)
        bound2 = 1.0 / math.sqrt(H)
        w1 = jax.random.uniform(k1, (C, H), jnp.float32, -bound1, bound1)  # fc1.weight.T
        b1 = jax.random.uniform(k2, (H,), jnp.float32, -bound1, bound1)    # fc1.bias
        w2 = jax.random.uniform(k3, (H, C), jnp.float32, -bound2, bound2)  # fc2.weight.T
        b2 = jax.random.uniform(k4, (C,), jnp.float32, -bound2, bound2)    # fc2.bias
        return w1, b1, w2, b2

    # --- small config: batch=2, seq=8, n_embd=32 -> hidden = 4*32 = 128 ------
    B, T, C = 2, 8, 32
    H = 4 * C
    kx, kp, kx2, kp2 = jax.random.split(key, 4)
    x = jax.random.normal(kx, (B, T, C), dtype=jnp.float32)
    w1, b1, w2, b2 = make_params(kp, C, H)
    # One-time parameter prep (bf16 weight cast happens here, not per call).
    pw1, pb1, pw2, pb2 = prepare_mlp_params(w1, b1, w2, b2)

    out = mlp_pallas(x, pw1, pb1, pw2, pb2)
    out = jax.block_until_ready(out)
    assert out.shape == (B, T, C)

    ref_bf16 = mlp_reference_bf16(x, w1, b1, w2, b2)
    assert jnp.allclose(out, ref_bf16, atol=1e-3, rtol=1e-3), \
        "mismatch vs bf16-matched reference"
    ref_f32 = mlp_reference_f32(x, w1, b1, w2, b2)
    assert jnp.allclose(out, ref_f32, atol=5e-2, rtol=5e-2), \
        "mismatch vs fp32 reference"

    # --- exercise the H-tiled fallback path (used when weights can't stay
    #     resident in VMEM, e.g. wide models on v7x) --------------------------
    B2, T2, C2 = 2, 64, 128
    H2 = 4 * C2
    x2 = jax.random.normal(kx2, (B2, T2, C2), dtype=jnp.float32)
    w1b, b1b, w2b, b2b = make_params(kp2, C2, H2)
    pw1b, pb1b, pw2b, pb2b = prepare_mlp_params(w1b, b1b, w2b, b2b)
    out2 = mlp_pallas(x2, pw1b, pb1b, pw2b, pb2b,
                      force_h_tiled=True, force_th=128)   # 4 accumulation steps
    out2 = jax.block_until_ready(out2)
    ref2 = mlp_reference_bf16(x2, w1b, b1b, w2b, b2b)
    assert jnp.allclose(out2, ref2, atol=2e-3, rtol=2e-3), \
        "H-tiled path mismatch vs bf16-matched reference"

    print("KERNEL_OK")
</pallas_src>

<mosaic_0001>
module attributes {stable_mosaic.version = 11 : i64} {
  func.func @_mlp_resident_kernel(%arg0: i32, %arg1: memref<16x32xf32, #tpu.memory_space<vmem>>, %arg2: memref<32x128xbf16, #tpu.memory_space<vmem>>, %arg3: memref<1x128xf32, #tpu.memory_space<vmem>>, %arg4: memref<128x32xbf16, #tpu.memory_space<vmem>>, %arg5: memref<1x32xf32, #tpu.memory_space<vmem>>, %arg6: memref<16x32xf32, #tpu.memory_space<vmem>>) attributes {dimension_semantics = [#tpu.dimension_semantics<parallel>], iteration_bounds = array<i64: 1>, scalar_prefetch = 0 : i64, scratch_operands = 0 : i64, tpu.core_type = #tpu.core_type<tc>, window_params = [{transform_indices = @transform_0, window_bounds = array<i64: 16, 32>}, {pipeline_mode = #tpu.pipeline_mode<synchronous>, transform_indices = @transform_1, window_bounds = array<i64: 32, 128>}, {pipeline_mode = #tpu.pipeline_mode<synchronous>, transform_indices = @transform_2, window_bounds = array<i64: 1, 128>}, {pipeline_mode = #tpu.pipeline_mode<synchronous>, transform_indices = @transform_3, window_bounds = array<i64: 128, 32>}, {pipeline_mode = #tpu.pipeline_mode<synchronous>, transform_indices = @transform_4, window_bounds = array<i64: 1, 32>}, {transform_indices = @transform_5, window_bounds = array<i64: 16, 32>}]} {
    %c0 = arith.constant 0 : index
    %c0_0 = arith.constant 0 : index
    %0 = vector.load %arg1[%c0, %c0_0] : memref<16x32xf32, #tpu.memory_space<vmem>>, vector<16x32xf32>
    %1 = arith.truncf %0 : vector<16x32xf32> to vector<16x32xbf16>
    %c0_1 = arith.constant 0 : index
    %c0_2 = arith.constant 0 : index
    %2 = vector.load %arg2[%c0_1, %c0_2] : memref<32x128xbf16, #tpu.memory_space<vmem>>, vector<32x128xbf16>
    %cst = arith.constant dense<0.000000e+00> : vector<16x128xf32>
    %3 = tpu.matmul %1, %2, %cst {dimension_numbers = #tpu.dot_dimension_numbers<[1], [0], [0], [1], [0, 0, 1, 1], [], []>} : vector<16x32xbf16>, vector<32x128xbf16>, vector<16x128xf32> -> vector<16x128xf32>
    %c0_3 = arith.constant 0 : index
    %c0_4 = arith.constant 0 : index
    %4 = vector.load %arg3[%c0_3, %c0_4] : memref<1x128xf32, #tpu.memory_space<vmem>>, vector<1x128xf32>
    %5 = vector.broadcast %4 : vector<1x128xf32> to vector<16x128xf32>
    %6 = arith.addf %3, %5 : vector<16x128xf32>
    %cst_5 = arith.constant 5.000000e-01 : f32
    %7 = vector.broadcast %cst_5 : f32 to vector<16x128xf32>
    %8 = arith.mulf %7, %6 : vector<16x128xf32>
    %cst_6 = arith.constant 0.707106769 : f32
    %9 = vector.broadcast %cst_6 : f32 to vector<16x128xf32>
    %10 = arith.mulf %6, %9 : vector<16x128xf32>
    %11 = math.erf %10 : vector<16x128xf32>
    %cst_7 = arith.constant 1.000000e+00 : f32
    %12 = vector.broadcast %cst_7 : f32 to vector<16x128xf32>
    %13 = arith.addf %12, %11 : vector<16x128xf32>
    %14 = arith.mulf %8, %13 : vector<16x128xf32>
    %15 = arith.truncf %14 : vector<16x128xf32> to vector<16x128xbf16>
    %c0_8 = arith.constant 0 : index
    %c0_9 = arith.constant 0 : index
    %16 = vector.load %arg4[%c0_8, %c0_9] : memref<128x32xbf16, #tpu.memory_space<vmem>>, vector<128x32xbf16>
    %cst_10 = arith.constant dense<0.000000e+00> : vector<16x32xf32>
    %17 = tpu.matmul %15, %16, %cst_10 {dimension_numbers = #tpu.dot_dimension_numbers<[1], [0], [0], [1], [0, 0, 1, 1], [], []>} : vector<16x128xbf16>, vector<128x32xbf16>, vector<16x32xf32> -> vector<16x32xf32>
    %c0_11 = arith.constant 0 : index
    %c0_12 = arith.constant 0 : index
    %18 = vector.load %arg5[%c0_11, %c0_12] : memref<1x32xf32, #tpu.memory_space<vmem>>, vector<1x32xf32>
    %19 = vector.broadcast %18 : vector<1x32xf32> to vector<16x32xf32>
    %20 = arith.addf %17, %19 : vector<16x32xf32>
    %c0_13 = arith.constant 0 : index
    %c0_14 = arith.constant 0 : index
    %21 = vector.load %arg6[%c0_13, %c0_14] : memref<16x32xf32, #tpu.memory_space<vmem>>, vector<16x32xf32>
    tpu.vector_store %arg6[%c0_13, %c0_14], %20 {strides = array<i32>} : memref<16x32xf32, #tpu.memory_space<vmem>>, vector<16x32xf32>,
    return
  }
  func.func @transform_0(%arg0: i32) -> (i32, i32) {
    %c0_i32 = arith.constant 0 : i32
    %c0_i32_0 = arith.constant 0 : i32
    return %arg0, %c0_i32 : i32, i32
  }
  func.func @transform_1(%arg0: i32) -> (i32, i32) {
    %c0_i32 = arith.constant 0 : i32
    %c0_i32_0 = arith.constant 0 : i32
    %c0_i32_1 = arith.constant 0 : i32
    return %c0_i32, %c0_i32_0 : i32, i32
  }
  func.func @transform_2(%arg0: i32) -> (i32, i32) {
    %c0_i32 = arith.constant 0 : i32
    %c0_i32_0 = arith.constant 0 : i32
    %c0_i32_1 = arith.constant 0 : i32
    return %c0_i32, %c0_i32_0 : i32, i32
  }
  func.func @transform_3(%arg0: i32) -> (i32, i32) {
    %c0_i32 = arith.constant 0 : i32
    %c0_i32_0 = arith.constant 0 : i32
    %c0_i32_1 = arith.constant 0 : i32
    return %c0_i32, %c0_i32_0 : i32, i32
  }
  func.func @transform_4(%arg0: i32) -> (i32, i32) {
    %c0_i32 = arith.constant 0 : i32
    %c0_i32_0 = arith.constant 0 : i32
    %c0_i32_1 = arith.constant 0 : i32
    return %c0_i32, %c0_i32_0 : i32, i32
  }
  func.func @transform_5(%arg0: i32) -> (i32, i32) {
    %c0_i32 = arith.constant 0 : i32
    %c0_i32_0 = arith.constant 0 : i32
    return %arg0, %c0_i32 : i32, i32
  }
}

</mosaic_0001>

<llo_original>
// kernel: tpu_custom_call.1
$region0: #{tpu_custom_call.1}
  #allocation0 [shape = 'u32[]', space=smem, size = 0x4, offset = 0x4, fixed_abs, tag = 'smem constant byte address 0x4 - core index']
  #allocation1 [shape = 'u32[144,128]{1,0:T(1,128)}', space=vmem, size = 0x12000, scoped, tag = 'internal scratch']
  %s0 = inlined_call_operand.vmem [shape: f32[16,32], index: 0, kind: input, shape index: {}]
  %s1 = inlined_call_operand.vmem [shape: bf16[32,128], index: 1, kind: input, shape index: {}]
  %s2 = inlined_call_operand.vmem [shape: f32[1,128], index: 2, kind: input, shape index: {}]
  %s3 = inlined_call_operand.vmem [shape: bf16[128,32], index: 3, kind: input, shape index: {}]
  %s4 = inlined_call_operand.vmem [shape: f32[1,32], index: 4, kind: input, shape index: {}]
  %s5 = inlined_call_operand.hbm [shape: f32[16,32], index: 5, kind: output, shape index: {}]
  %s6 = sld [smem:[#allocation0]]
  $region30: #{tpu_custom_call.1} parent=0
    _
  %s8 = ssub.s32 1, %s6
  %s9 = scalar_select 0, %s8, %s6
  $region1: #{tpu_custom_call.1} parent=0
    #allocation2 [shape = 'u8[8192]{0}', space=vmem, size = 0x2000, scoped, tag = 'output window, operand 0, single buffered']
    #allocation3 [shape = 's32[1]{0}', space=sflag, size = 0x4, scoped, tag = 'scoped memory for tpu_custom_call.1']
    %10 = vsyncpa [#allocation3], 0
    // Predicated region
    $region2: #{tpu_custom_call.1} parent=1 // pred_check
      _
    $region3: #{tpu_custom_call.1} parent=1 // pred_check_branch
      %12 = sbr.rel (0) target = $region5
    $region4: #{tpu_custom_call.1} parent=1 // pred_region
      _
    $region5: #{tpu_custom_call.1} parent=1 // pred_fallthru
      _
    // Predicated region
    $region6: #{tpu_custom_call.1} parent=1 // pred_check
      _
    $region7: #{tpu_custom_call.1} parent=1 // pred_check_branch
      %14 = sbr.rel (0) target = $region9
    $region8: #{tpu_custom_call.1} parent=1 // pred_region
      _
    $region9: #{tpu_custom_call.1} parent=1 // pred_fallthru
      _
    // Predicated region
    $region10: #{tpu_custom_call.1} parent=1 // pred_check
      _
    $region11: #{tpu_custom_call.1} parent=1 // pred_check_branch
      %16 = sbr.rel (0) target = $region13
    $region12: #{tpu_custom_call.1} parent=1 // pred_region
      _
    $region13: #{tpu_custom_call.1} parent=1 // pred_fallthru
      _
    // Predicated region
    $region14: #{tpu_custom_call.1} parent=1 // pred_check
      _
    $region15: #{tpu_custom_call.1} parent=1 // pred_check_branch
      %18 = sbr.rel (0) target = $region17
    $region16: #{tpu_custom_call.1} parent=1 // pred_region
      _
    $region17: #{tpu_custom_call.1} parent=1 // pred_fallthru
      _
    // Predicated region
    $region18: #{tpu_custom_call.1} parent=1 // pred_check
      _
    $region19: #{tpu_custom_call.1} parent=1 // pred_check_branch
      %20 = sbr.rel (0) target = $region21
    $region20: #{tpu_custom_call.1} parent=1 // pred_region
      _
    $region21: #{tpu_custom_call.1} parent=1 // pred_fallthru
      _
    %v22 = vld [vmem:[%s0] sm:$0xff]
    %v23 = vld [vmem:[%s0 + $0x8] sm:$0xff]
    %v24 = vpack.c.bf16 %v23, %v22
    %v25 = vld [vmem:[%s1] sm:$0xf]
    %v26 = vld [vmem:[%s1 + $0x4] sm:$0xf]
    %v27 = vld [vmem:[%s1 + $0x8] sm:$0xf]
    %v28 = vld [vmem:[%s1 + $0xc] sm:$0xf]
    %v29 = vld [vmem:[%s2] sm:$0x1]
    %v31 = vlaneseq
    %v32 = vshrl.u32 %v31, 7
    %v33 = vsub.s32 0, %v32
    %v34 = vrot.slane %v29, %v33
    %v40 = vunpack.c.l.b16 %v25
    %v41 = vunpack.c.l.b16 %v26
    %v42 = vunpack.c.l.b16 %v27
    %v43 = vunpack.c.l.b16 %v28
    %v44 = vpack.c.b16 %v41, %v40
    %v45 = vpack.c.b16 %v43, %v42
    %vm48 = vcmask 261120
    %v50 = vsel %vm48, %v24, 0
    %52 = vmatprep.subr.bf16.mxu0 0
    %53 = vmatpush1.bf16.msra.mxu0 %v44
    %54 = vmatprep.subr.bf16.mxu0 0
    %55 = vmatpush1.bf16.msra.mxu0 %v45
    %56 = vmatprep.subr.bf16.mxu0 0
    %57 = vmatpush1.bf16.msra.mxu0 0
    %58 = vmatprep.subr.bf16.mxu0 0
    %59 = vmatpush1.bf16.msra.mxu0 0
    %60 = vmatprep.subr.bf16.mxu0 0
    %61 = vmatpush1.bf16.msra.mxu0 0
    %62 = vmatprep.subr.bf16.mxu0 0
    %63 = vmatpush1.bf16.msra.mxu0 0
    %64 = vmatprep.subr.bf16.mxu0 0
    %65 = vmatpush1.bf16.msra.mxu0 0
    %66 = vmatprep.subr.bf16.mxu0 0
    %67 = vmatpush1.bf16.msra.mxu0 0
    %68 = vmatprep.subr.bf16.mxu0 0
    %69 = vmatpush1.bf16.msra.mxu0 0
    %70 = vmatprep.subr.bf16.mxu0 0
    %71 = vmatpush1.bf16.msra.mxu0 0
    %72 = vmatprep.subr.bf16.mxu0 0
    %73 = vmatpush1.bf16.msra.mxu0 0
    %74 = vmatprep.subr.bf16.mxu0 0
    %75 = vmatpush1.bf16.msra.mxu0 0
    %76 = vmatprep.subr.bf16.mxu0 0
    %77 = vmatpush1.bf16.msra.mxu0 0
    %78 = vmatprep.subr.bf16.mxu0 0
    %79 = vmatpush1.bf16.msra.mxu0 0
    %80 = vmatprep.subr.bf16.mxu0 0
    %81 = vmatpush1.bf16.msra.mxu0 0
    %82 = vmatprep.subr.bf16.mxu0 0
    %83 = vmatpush1.bf16.msra.mxu0 0
    %84 = vmatprep.mubr.bf16.mxu0 0
    %85 = vmatmul.mubr.bf16.gmra.mrb[0].mxu0 %v50
    %v86 = vpop.f32.mrb[0].mxu0
    %v87 = vadd.f32 %v34, %v86
    %v88 = vpop.f32.mrb[0].mxu0
    %v89 = vpop.f32.mrb[0].mxu0
    %v90 = vadd.f32 %v34, %v89
    %v91 = vpop.f32.mrb[0].mxu0
    %92 = vdwg.mxu0
    %v93 = vmul.f32 %v87, 0.5
    %v94 = vmul.f32 %v90, 0.5
    %v95 = vmul.f32 %v87, 0.70710677
    %v96 = vmul.f32 %v90, 0.70710677
    %v97 = verf.f32.pop %v95
    %v98 = verf.f32.pop %v96
    %v99 = vadd.f32 %v97, 1.0
    %v100 = vadd.f32 %v98, 1.0
    %v101 = vmul.f32 %v93, %v99
    %v102 = vmul.f32 %v94, %v100
    %v103 = vpack.c.bf16 %v102, %v101
    %v104 = vld [vmem:[%s3] sm:$0xf]
    %v105 = vld [vmem:[%s3 + $0x4] sm:$0xf]
    %v106 = vld [vmem:[%s3 + $0x8] sm:$0xf]
    %v107 = vld [vmem:[%s3 + $0xc] sm:$0xf]
    %v108 = vld [vmem:[%s3 + $0x10] sm:$0xf]
    %v109 = vld [vmem:[%s3 + $0x14] sm:$0xf]
    %v110 = vld [vmem:[%s3 + $0x18] sm:$0xf]
    %v111 = vld [vmem:[%s3 + $0x1c] sm:$0xf]
    %v112 = vld [vmem:[%s3 + $0x20] sm:$0xf]
    %v113 = vld [vmem:[%s3 + $0x24] sm:$0xf]
    %v114 = vld [vmem:[%s3 + $0x28] sm:$0xf]
    %v115 = vld [vmem:[%s3 + $0x2c] sm:$0xf]
    %v116 = vld [vmem:[%s3 + $0x30] sm:$0xf]
    %v117 = vld [vmem:[%s3 + $0x34] sm:$0xf]
    %v118 = vld [vmem:[%s3 + $0x38] sm:$0xf]
    %v119 = vld [vmem:[%s3 + $0x3c] sm:$0xf]
    %v120 = vld [vmem:[%s4] sm:$0x1]
    %v122 = vlaneseq
    %v123 = vshrl.u32 %v122, 7
    %v124 = vsub.s32 0, %v123
    %v125 = vrot.slane %v120, %v124
    %v143 = vunpack.c.l.b16 %v104
    %v144 = vunpack.c.l.b16 %v105
    %v145 = vunpack.c.l.b16 %v106
    %v146 = vunpack.c.l.b16 %v107
    %v147 = vunpack.c.l.b16 %v108
    %v148 = vunpack.c.l.b16 %v109
    %v149 = vunpack.c.l.b16 %v110
    %v150 = vunpack.c.l.b16 %v111
    %v151 = vunpack.c.l.b16 %v112
    %v152 = vunpack.c.l.b16 %v113
    %v153 = vunpack.c.l.b16 %v114
    %v154 = vunpack.c.l.b16 %v115
    %v155 = vunpack.c.l.b16 %v116
    %v156 = vunpack.c.l.b16 %v117
    %v157 = vunpack.c.l.b16 %v118
    %v158 = vunpack.c.l.b16 %v119
    %v159 = vpack.c.b16 %v144, %v143
    %v160 = vpack.c.b16 %v146, %v145
    %v161 = vpack.c.b16 %v148, %v147
    %v162 = vpack.c.b16 %v150, %v149
    %v163 = vpack.c.b16 %v152, %v151
    %v164 = vpack.c.b16 %v154, %v153
    %v165 = vpack.c.b16 %v156, %v155
    %v166 = vpack.c.b16 %v158, %v157
    %175 = vmatprep.subr.bf16.mxu0 0
    %176 = vmatpush1.bf16.msra.mxu0 %v159
    %177 = vmatprep.subr.bf16.mxu0 0
    %178 = vmatpush1.bf16.msra.mxu0 %v160
    %179 = vmatprep.subr.bf16.mxu0 0
    %180 = vmatpush1.bf16.msra.mxu0 %v161
    %181 = vmatprep.subr.bf16.mxu0 0
    %182 = vmatpush1.bf16.msra.mxu0 %v162
    %183 = vmatprep.subr.bf16.mxu0 0
    %184 = vmatpush1.bf16.msra.mxu0 %v163
    %185 = vmatprep.subr.bf16.mxu0 0
    %186 = vmatpush1.bf16.msra.mxu0 %v164
    %187 = vmatprep.subr.bf16.mxu0 0
    %188 = vmatpush1.bf16.msra.mxu0 %v165
    %189 = vmatprep.subr.bf16.mxu0 0
    %190 = vmatpush1.bf16.msra.mxu0 %v166
    %191 = vmatprep.subr.bf16.mxu0 0
    %192 = vmatpush1.bf16.msra.mxu0 0
    %193 = vmatprep.subr.bf16.mxu0 0
    %194 = vmatpush1.bf16.msra.mxu0 0
    %195 = vmatprep.subr.bf16.mxu0 0
    %196 = vmatpush1.bf16.msra.mxu0 0
    %197 = vmatprep.subr.bf16.mxu0 0
    %198 = vmatpush1.bf16.msra.mxu0 0
    %199 = vmatprep.subr.bf16.mxu0 0
    %200 = vmatpush1.bf16.msra.mxu0 0
    %201 = vmatprep.subr.bf16.mxu0 0
    %202 = vmatpush1.bf16.msra.mxu0 0
    %203 = vmatprep.subr.bf16.mxu0 0
    %204 = vmatpush1.bf16.msra.mxu0 0
    %205 = vmatprep.subr.bf16.mxu0 0
    %206 = vmatpush1.bf16.msra.mxu0 0
    %207 = vmatprep.mubr.bf16.mxu0 0
    %208 = vmatmul.mubr.bf16.gmra.mrb[0].mxu0 %v103
    %v209 = vpop.f32.mrb[0].mxu0
    %v210 = vadd.f32 %v125, %v209
    %v211 = vpop.f32.mrb[0].mxu0
    %v212 = vpop.f32.mrb[0].mxu0
    %v213 = vadd.f32 %v125, %v212
    %v214 = vpop.f32.mrb[0].mxu0
    %215 = vdwg.mxu0
    %216 = vst.msk [vmem:[#allocation2] sm:$0xff] %vm48, %v210
    %217 = vst.msk [vmem:[#allocation2 + $0x8] sm:$0xff] %vm48, %v213
    // Predicated region
    $region22: #{tpu_custom_call.1} parent=1 // pred_check
      _
    $region23: #{tpu_custom_call.1} parent=1 // pred_check_branch
      %219 = sbr.rel (0) target = $region25
    $region24: #{tpu_custom_call.1} parent=1 // pred_region
      %s221 = ssub.s32 256, 256
      %222 = vsyncadd [#allocation3], %s221
      %s223 = sshll.u32 [#allocation2], 4
      %s224 = int_to_ptr.vmem [resolvable:$true] %s223
      %229 = dma.vmem_to_hbm [thread:$0]  %s224, 256, %s5, [#allocation3], 128, 128, 8
    $region25: #{tpu_custom_call.1} parent=1 // pred_fallthru
      _
    // Predicated region
    $region26: #{tpu_custom_call.1} parent=1 // pred_check
      _
    $region27: #{tpu_custom_call.1} parent=1 // pred_check_branch
      %231 = sbr.rel (0) target = $region29
    $region28: #{tpu_custom_call.1} parent=1 // pred_region
      %232 = dma.done [#allocation3], 256
    $region29: #{tpu_custom_call.1} parent=1 // pred_fallthru
      _
    %233 = vsyncpa [#allocation3], 1

</llo_original>
